<compile_context>
chip_gen: v6e
topology: v6e:2x2x1
jax: 0.10.0
libtpu: 0.0.40
codegen_flags: <defaults>
</compile_context>

<pallas_src>
import jax
import jax.numpy as jnp
from jax.experimental import pallas as pl
from jax.experimental.pallas import tpu as pltpu


def _round_up(a: int, b: int) -> int:
    return (a + b - 1) // b * b


def _make_hdr_loss_kernel(eps: float, tm: int, w: int):
    """Kernel over one (tm, w) interleaved [re, im, re, im, ...] f32 block."""

    def kernel(x_ref, t_ref, o_ref):
        x = x_ref[...]                       # (tm, w) input, interleaved re/im
        t = t_ref[...]                       # (tm, w) target

        e = x - t
        e2 = e * e                           # per-float |error component|^2
        x2 = x * x                           # per-float |input component|^2

        # Pair-sum adjacent lanes: rolled[i] = v[(i + 1) % w]  (shift = w-1 == -1),
        # so even lane 2k holds v[2k] + v[2k+1], i.e. re^2 + im^2 of complex k.
        e2p = e2 + pltpu.roll(e2, shift=w - 1, axis=1)   # |error|^2 at even lanes
        x2p = x2 + pltpu.roll(x2, shift=w - 1, axis=1)   # |input|^2 at even lanes

        mag = jnp.sqrt(x2p)                  # |input|
        d = mag + eps
        d2 = d * d
        loss = e2p / (d2 * d2)               # |error|^2 / (|input| + eps)^4

        # Keep only even lanes (one value per complex element); odd lanes are
        # garbage pairings. Denominator >= eps^4 > 0 so odd-lane values are
        # finite and the mask is safe.
        lane = jax.lax.broadcasted_iota(jnp.int32, (tm, w), 1)
        masked = jnp.where((lane & 1) == 0, loss, 0.0)

        # Fold tm rows down to an (8, w) vector partial sum with plain VPU adds
        # (static 8-row slices are aligned vreg selections; no XLU reduce in the
        # hot loop). The full cross-lane reduce happens outside the kernel.
        parts = masked[0:8, :]
        for r in range(8, tm, 8):
            parts = parts + masked[r:r + 8, :]
        o_ref[0] = parts

    return kernel


def adaptive_hdr_loss(inp, tgt, *, eps=1e-3, block_rows=512, lanes=512):
    """inp, tgt: float32 arrays of shape (..., 2) (real/imag interleaved)."""
    assert inp.shape == tgt.shape
    assert inp.shape[-1] == 2
    inp = inp.astype(jnp.float32)
    tgt = tgt.astype(jnp.float32)

    n_float = inp.size
    n_complex = n_float // 2                 # what .mean() divides by

    w = lanes                                # lane width, multiple of 128
    rows = -(-n_float // w)                  # cdiv
    tm = min(block_rows, _round_up(rows, 8)) # block row count (multiple of 8)
    m = _round_up(rows, tm)                  # padded slab rows (multiple of tm)
    pad = m * w - n_float

    xf = inp.reshape(-1)                     # no-copy flatten, stays interleaved
    tf = tgt.reshape(-1)
    if pad:
        # Zero padding: err = 0 and |input| = 0  ->  loss contribution is exactly 0.
        xf = jnp.pad(xf, (0, pad))
        tf = jnp.pad(tf, (0, pad))
    x2d = xf.reshape(m, w)
    t2d = tf.reshape(m, w)

    num_blocks = m // tm
    in_spec = pl.BlockSpec((tm, w), lambda i: (i, 0))
    out_spec = pl.BlockSpec((1, 8, w), lambda i: (i, 0, 0))

    partials = pl.pallas_call(
        _make_hdr_loss_kernel(eps, tm, w),
        out_shape=jax.ShapeDtypeStruct((num_blocks, 8, w), jnp.float32),
        grid=(num_blocks,),
        in_specs=[in_spec, in_spec],
        out_specs=out_spec,
        compiler_params=pltpu.CompilerParams(
            dimension_semantics=("parallel",),   # independent blocks -> v7x megacore
        ),
    )(x2d, t2d)

    return jnp.sum(partials) / jnp.float32(n_complex)


def _reference(inp, tgt, eps):
    cin = jax.lax.complex(inp[..., 0], inp[..., 1])
    ctg = jax.lax.complex(tgt[..., 0], tgt[..., 1])
    err = cin - ctg
    loss = (jnp.abs(err) / (jnp.abs(cin) + eps) ** 2) ** 2
    return jnp.mean(loss)


if __name__ == "__main__":
    # config = {'hdr_ff_sigma': 1.0, 'eps': 1e-3, 'hdr_ff_factor': 0.5}
    # sigma / factor are unused in forward(); only eps matters.
    eps = 1e-3

    key = jax.random.PRNGKey(0)
    k1, k2 = jax.random.split(key)
    # complex field over (B=2, C=4, 16, 16) stored as float with trailing
    # real/imag axis of size 2 (torch.view_as_complex convention).
    shape = (2, 4, 16, 16, 2)
    x = jax.random.normal(k1, shape, dtype=jnp.float32)
    y = x + 0.1 * jax.random.normal(k2, shape, dtype=jnp.float32)

    loss = adaptive_hdr_loss(x, y, eps=eps)
    jax.block_until_ready(loss)
    ref = _reference(x, y, eps)
    assert jnp.allclose(loss, ref, rtol=1e-4, atol=1e-6), (loss, ref)

    # Non-tile-aligned shape: exercises the zero-padding path.
    k3, k4 = jax.random.split(k2)
    shape2 = (3, 5, 7, 2)
    x2 = jax.random.normal(k3, shape2, dtype=jnp.float32)
    y2 = x2 + 0.1 * jax.random.normal(k4, shape2, dtype=jnp.float32)
    loss2 = adaptive_hdr_loss(x2, y2, eps=eps)
    jax.block_until_ready(loss2)
    ref2 = _reference(x2, y2, eps)
    assert jnp.allclose(loss2, ref2, rtol=1e-4, atol=1e-6), (loss2, ref2)

    print("KERNEL_OK")
</pallas_src>

<mosaic_0001>
module attributes {stable_mosaic.version = 11 : i64} {
  func.func @kernel(%arg0: i32, %arg1: memref<8x512xf32, #tpu.memory_space<vmem>>, %arg2: memref<8x512xf32, #tpu.memory_space<vmem>>, %arg3: memref<1x8x512xf32, #tpu.memory_space<vmem>>) attributes {dimension_semantics = [#tpu.dimension_semantics<parallel>], iteration_bounds = array<i64: 1>, scalar_prefetch = 0 : i64, scratch_operands = 0 : i64, tpu.core_type = #tpu.core_type<tc>, window_params = [{transform_indices = @transform_0, window_bounds = array<i64: 8, 512>}, {transform_indices = @transform_1, window_bounds = array<i64: 8, 512>}, {transform_indices = @transform_2, window_bounds = array<i64: 1, 8, 512>}]} {
    %c0 = arith.constant 0 : index
    %c0_0 = arith.constant 0 : index
    %0 = vector.load %arg1[%c0, %c0_0] : memref<8x512xf32, #tpu.memory_space<vmem>>, vector<8x512xf32>
    %c0_1 = arith.constant 0 : index
    %c0_2 = arith.constant 0 : index
    %1 = vector.load %arg2[%c0_1, %c0_2] : memref<8x512xf32, #tpu.memory_space<vmem>>, vector<8x512xf32>
    %2 = arith.subf %0, %1 : vector<8x512xf32>
    %3 = arith.mulf %2, %2 : vector<8x512xf32>
    %4 = arith.mulf %0, %0 : vector<8x512xf32>
    %c511_i32 = arith.constant 511 : i32
    %5 = tpu.dynamic_rotate %3 by %c511_i32 dim 1 : vector<8x512xf32>, i32 -> vector<8x512xf32>
    %6 = arith.addf %3, %5 : vector<8x512xf32>
    %c511_i32_3 = arith.constant 511 : i32
    %7 = tpu.dynamic_rotate %4 by %c511_i32_3 dim 1 : vector<8x512xf32>, i32 -> vector<8x512xf32>
    %8 = arith.addf %4, %7 : vector<8x512xf32>
    %9 = math.sqrt %8 : vector<8x512xf32>
    %cst = arith.constant 1.000000e-03 : f32
    %10 = vector.broadcast %cst : f32 to vector<8x512xf32>
    %11 = arith.addf %9, %10 : vector<8x512xf32>
    %12 = arith.mulf %11, %11 : vector<8x512xf32>
    %13 = arith.mulf %12, %12 : vector<8x512xf32>
    %14 = arith.divf %6, %13 : vector<8x512xf32>
    %15 = tpu.iota {dimensions = array<i32: 1>} : vector<8x512xi32>
    %c1_i32 = arith.constant 1 : i32
    %16 = vector.broadcast %c1_i32 : i32 to vector<8x512xi32>
    %17 = arith.andi %15, %16 : vector<8x512xi32>
    %c0_i32 = arith.constant 0 : i32
    %18 = vector.broadcast %c0_i32 : i32 to vector<8x512xi32>
    %19 = arith.cmpi eq, %17, %18 : vector<8x512xi32>
    %cst_4 = arith.constant 0.000000e+00 : f32
    %20 = vector.broadcast %cst_4 : f32 to vector<8x512xf32>
    %21 = arith.select %19, %14, %20 : vector<8x512xi1>, vector<8x512xf32>
    %c0_5 = arith.constant 0 : index
    %c0_6 = arith.constant 0 : index
    %c0_7 = arith.constant 0 : index
    %22 = vector.load %arg3[%c0_5, %c0_6, %c0_7] : memref<1x8x512xf32, #tpu.memory_space<vmem>>, vector<1x8x512xf32>
    %23 = vector.shape_cast %22 : vector<1x8x512xf32> to vector<8x512xf32>
    %24 = vector.shape_cast %21 : vector<8x512xf32> to vector<1x8x512xf32>
    tpu.vector_store %arg3[%c0_5, %c0_6, %c0_7], %24 {strides = array<i32>} : memref<1x8x512xf32, #tpu.memory_space<vmem>>, vector<1x8x512xf32>,
    return
  }
  func.func @transform_0(%arg0: i32) -> (i32, i32) {
    %c0_i32 = arith.constant 0 : i32
    %c0_i32_0 = arith.constant 0 : i32
    return %arg0, %c0_i32 : i32, i32
  }
  func.func @transform_1(%arg0: i32) -> (i32, i32) {
    %c0_i32 = arith.constant 0 : i32
    %c0_i32_0 = arith.constant 0 : i32
    return %arg0, %c0_i32 : i32, i32
  }
  func.func @transform_2(%arg0: i32) -> (i32, i32, i32) {
    %c0_i32 = arith.constant 0 : i32
    %c0_i32_0 = arith.constant 0 : i32
    %c0_i32_1 = arith.constant 0 : i32
    return %arg0, %c0_i32, %c0_i32_0 : i32, i32, i32
  }
}

</mosaic_0001>

<llo_original>
// kernel: tpu_custom_call.1
$region0: #{tpu_custom_call.1}
  #allocation0 [shape = 'u32[]', space=smem, size = 0x4, offset = 0x4, fixed_abs, tag = 'smem constant byte address 0x4 - core index']
  #allocation1 [shape = 'u32[144,128]{1,0:T(1,128)}', space=vmem, size = 0x12000, scoped, tag = 'internal scratch']
  %s0 = inlined_call_operand.hbm [shape: f32[8,512], index: 0, kind: input, shape index: {}]
  %s1 = inlined_call_operand.hbm [shape: f32[8,512], index: 1, kind: input, shape index: {}]
  %s2 = inlined_call_operand.hbm [shape: f32[1,8,512], index: 2, kind: output, shape index: {}]
  %s3 = sld [smem:[#allocation0]]
  $region26: #{tpu_custom_call.1} parent=0
    _
  %s5 = ssub.s32 1, %s3
  %s6 = scalar_select 0, %s5, %s3
  $region1: #{tpu_custom_call.1} parent=0
    #allocation2 [shape = 'u8[16384]{0}', space=vmem, size = 0x4000, scoped, tag = 'input window, operand 0, single buffered']
    #allocation3 [shape = 's32[1]{0}', space=sflag, size = 0x4, scoped, tag = 'scoped memory for tpu_custom_call.1']
    #allocation4 [shape = 's32[1]{0}', space=sflag, size = 0x4, scoped, tag = 'scoped memory for tpu_custom_call.1']
    #allocation5 [shape = 'u8[16384]{0}', space=vmem, size = 0x4000, scoped, tag = 'input window, operand 1, single buffered']
    #allocation6 [shape = 's32[1]{0}', space=sflag, size = 0x4, scoped, tag = 'scoped memory for tpu_custom_call.1']
    #allocation7 [shape = 'u8[16384]{0}', space=vmem, size = 0x4000, scoped, tag = 'output window, operand 0, single buffered']
    %7 = vsyncpa [#allocation3], 0
    %8 = vsyncpa [#allocation6], 0
    %9 = vsyncpa [#allocation4], 0
    // Predicated region
    $region2: #{tpu_custom_call.1} parent=1 // pred_check
      _
    $region3: #{tpu_custom_call.1} parent=1 // pred_check_branch
      %11 = sbr.rel (0) target = $region5
    $region4: #{tpu_custom_call.1} parent=1 // pred_region
      %s13 = ssub.s32 512, 512
      %14 = vsyncadd [#allocation3], %s13
      %s16 = sshll.u32 [#allocation2], 4
      %s17 = int_to_ptr.vmem [resolvable:$true] %s16
      %19 = dma.hbm_to_vmem [thread:$0]  %s0, 512, %s17, [#allocation3]
    $region5: #{tpu_custom_call.1} parent=1 // pred_fallthru
      _
    // Predicated region
    $region6: #{tpu_custom_call.1} parent=1 // pred_check
      _
    $region7: #{tpu_custom_call.1} parent=1 // pred_check_branch
      %21 = sbr.rel (0) target = $region9
    $region8: #{tpu_custom_call.1} parent=1 // pred_region
      %s23 = ssub.s32 512, 512
      %24 = vsyncadd [#allocation6], %s23
      %s26 = sshll.u32 [#allocation5], 4
      %s27 = int_to_ptr.vmem [resolvable:$true] %s26
      %29 = dma.hbm_to_vmem [thread:$0]  %s1, 512, %s27, [#allocation6]
    $region9: #{tpu_custom_call.1} parent=1 // pred_fallthru
      _
    // Predicated region
    $region10: #{tpu_custom_call.1} parent=1 // pred_check
      _
    $region11: #{tpu_custom_call.1} parent=1 // pred_check_branch
      %31 = sbr.rel (0) target = $region13
    $region12: #{tpu_custom_call.1} parent=1 // pred_region
      %32 = dma.done [#allocation3], 512
    $region13: #{tpu_custom_call.1} parent=1 // pred_fallthru
      _
    // Predicated region
    $region14: #{tpu_custom_call.1} parent=1 // pred_check
      _
    $region15: #{tpu_custom_call.1} parent=1 // pred_check_branch
      %34 = sbr.rel (0) target = $region17
    $region16: #{tpu_custom_call.1} parent=1 // pred_region
      %35 = dma.done [#allocation6], 512
    $region17: #{tpu_custom_call.1} parent=1 // pred_fallthru
      _
    %v36 = vld [vmem:[#allocation2] sm:$0xff]
    %v37 = vld [vmem:[#allocation2 + $0x8] sm:$0xff]
    %v38 = vld [vmem:[#allocation2 + $0x10] sm:$0xff]
    %v39 = vld [vmem:[#allocation2 + $0x18] sm:$0xff]
    %v40 = vld [vmem:[#allocation5] sm:$0xff]
    %v41 = vld [vmem:[#allocation5 + $0x8] sm:$0xff]
    %v42 = vld [vmem:[#allocation5 + $0x10] sm:$0xff]
    %v43 = vld [vmem:[#allocation5 + $0x18] sm:$0xff]
    %v44 = vsub.f32 %v36, %v40
    %v45 = vsub.f32 %v37, %v41
    %v46 = vsub.f32 %v38, %v42
    %v47 = vsub.f32 %v39, %v43
    %v48 = vmul.f32 %v44, %v44
    %v49 = vmul.f32 %v45, %v45
    %v50 = vmul.f32 %v46, %v46
    %v51 = vmul.f32 %v47, %v47
    %v52 = vmul.f32 %v36, %v36
    %v53 = vmul.f32 %v37, %v37
    %v54 = vmul.f32 %v38, %v38
    %v55 = vmul.f32 %v39, %v39
    %56 = vrot.lane.b32.xlu0 %v48, 127
    %v57 = vpop.permute.xlu0 %56
    %58 = vrot.lane.b32.xlu0 %v49, 127
    %v59 = vpop.permute.xlu0 %58
    %60 = vrot.lane.b32.xlu0 %v50, 127
    %v61 = vpop.permute.xlu0 %60
    %62 = vrot.lane.b32.xlu0 %v51, 127
    %v63 = vpop.permute.xlu0 %62
    %v64 = vlaneseq
    %v65 = vand.u32 %v64, 127
    %vm66 = vcmp.lt.s32.totalorder %v65, 127
    %v67 = vsel %vm66, %v61, %v63
    %v68 = vsel %vm66, %v59, %v61
    %v69 = vsel %vm66, %v57, %v59
    %v70 = vsel %vm66, %v63, %v57
    %v71 = vadd.f32 %v48, %v69
    %v72 = vadd.f32 %v49, %v68
    %v73 = vadd.f32 %v50, %v67
    %v74 = vadd.f32 %v51, %v70
    %75 = vrot.lane.b32.xlu0 %v52, 127
    %v76 = vpop.permute.xlu0 %75
    %77 = vrot.lane.b32.xlu0 %v53, 127
    %v78 = vpop.permute.xlu0 %77
    %79 = vrot.lane.b32.xlu0 %v54, 127
    %v80 = vpop.permute.xlu0 %79
    %81 = vrot.lane.b32.xlu0 %v55, 127
    %v82 = vpop.permute.xlu0 %81
    %v83 = vsel %vm66, %v80, %v82
    %v84 = vsel %vm66, %v78, %v80
    %v85 = vsel %vm66, %v76, %v78
    %v86 = vsel %vm66, %v82, %v76
    %v87 = vadd.f32 %v52, %v85
    %v88 = vadd.f32 %v53, %v84
    %v89 = vadd.f32 %v54, %v83
    %v90 = vadd.f32 %v55, %v86
    %v91 = vrsqrt.pop %v87
    %v92 = vmul.f32 %v87, %v91
    %vm93 = vcmp.eq.f32.partialorder %v87, inf
    %v94 = vsel %vm93, %v87, %v92
    %vm95 = vcmp.eq.f32.partialorder %v87, 0.0
    %v96 = vand.u32 %v87, 2147483648
    %v97 = vsel %vm95, %v96, %v94
    %v98 = vrsqrt.pop %v88
    %v99 = vmul.f32 %v88, %v98
    %vm100 = vcmp.eq.f32.partialorder %v88, inf
    %v101 = vsel %vm100, %v88, %v99
    %vm102 = vcmp.eq.f32.partialorder %v88, 0.0
    %v103 = vand.u32 %v88, 2147483648
    %v104 = vsel %vm102, %v103, %v101
    %v105 = vrsqrt.pop %v89
    %v106 = vmul.f32 %v89, %v105
    %vm107 = vcmp.eq.f32.partialorder %v89, inf
    %v108 = vsel %vm107, %v89, %v106
    %vm109 = vcmp.eq.f32.partialorder %v89, 0.0
    %v110 = vand.u32 %v89, 2147483648
    %v111 = vsel %vm109, %v110, %v108
    %v112 = vrsqrt.pop %v90
    %v113 = vmul.f32 %v90, %v112
    %vm114 = vcmp.eq.f32.partialorder %v90, inf
    %v115 = vsel %vm114, %v90, %v113
    %vm116 = vcmp.eq.f32.partialorder %v90, 0.0
    %v117 = vand.u32 %v90, 2147483648
    %v118 = vsel %vm116, %v117, %v115
    %v119 = vadd.f32 %v97, 0.001
    %v120 = vadd.f32 %v104, 0.001
    %v121 = vadd.f32 %v111, 0.001
    %v122 = vadd.f32 %v118, 0.001
    %v123 = vmul.f32 %v119, %v119
    %v124 = vmul.f32 %v120, %v120
    %v125 = vmul.f32 %v121, %v121
    %v126 = vmul.f32 %v122, %v122
    %v127 = vmul.f32 %v123, %v123
    %v128 = vmul.f32 %v124, %v124
    %v129 = vmul.f32 %v125, %v125
    %v130 = vmul.f32 %v126, %v126
    %v131 = vrcp.pop %v127
    %v132 = vmul.f32 %v71, %v131
    %v133 = vrcp.pop %v128
    %v134 = vmul.f32 %v72, %v133
    %v135 = vrcp.pop %v129
    %v136 = vmul.f32 %v73, %v135
    %v137 = vrcp.pop %v130
    %v138 = vmul.f32 %v74, %v137
    %v139 = vadd.s32 %v65, 128
    %v140 = vadd.s32 %v65, 256
    %v141 = vadd.s32 %v65, 384
    %v142 = vand.u32 %v65, 1
    %v143 = vand.u32 %v139, 1
    %v144 = vand.u32 %v140, 1
    %v145 = vand.u32 %v141, 1
    %vm146 = vcmp.eq.s32.totalorder %v142, 0
    %vm147 = vcmp.eq.s32.totalorder %v143, 0
    %vm148 = vcmp.eq.s32.totalorder %v144, 0
    %vm149 = vcmp.eq.s32.totalorder %v145, 0
    %v150 = vsel %vm146, %v132, 0.0
    %v151 = vsel %vm147, %v134, 0.0
    %v152 = vsel %vm148, %v136, 0.0
    %v153 = vsel %vm149, %v138, 0.0
    %154 = vst [vmem:[#allocation7] sm:$0xff] %v150
    %155 = vst [vmem:[#allocation7 + $0x8] sm:$0xff] %v151
    %156 = vst [vmem:[#allocation7 + $0x10] sm:$0xff] %v152
    %157 = vst [vmem:[#allocation7 + $0x18] sm:$0xff] %v153
    // Predicated region
    $region18: #{tpu_custom_call.1} parent=1 // pred_check
      _
    $region19: #{tpu_custom_call.1} parent=1 // pred_check_branch
      %159 = sbr.rel (0) target = $region21
    $region20: #{tpu_custom_call.1} parent=1 // pred_region
      %s161 = ssub.s32 512, 512
      %162 = vsyncadd [#allocation4], %s161
      %s164 = sshll.u32 [#allocation7], 4
      %s165 = int_to_ptr.vmem [resolvable:$true] %s164
      %167 = dma.vmem_to_hbm [thread:$0]  %s165, 512, %s2, [#allocation4]
    $region21: #{tpu_custom_call.1} parent=1 // pred_fallthru
      _
    // Predicated region
    $region22: #{tpu_custom_call.1} parent=1 // pred_check
      _
    $region23: #{tpu_custom_call.1} parent=1 // pred_check_branch
      %169 = sbr.rel (0) target = $region25
    $region24: #{tpu_custom_call.1} parent=1 // pred_region
      %170 = dma.done [#allocation4], 512
    $region25: #{tpu_custom_call.1} parent=1 // pred_fallthru
      _
    %171 = vsyncpa [#allocation3], 1
    %172 = vsyncpa [#allocation6], 1
    %173 = vsyncpa [#allocation4], 1

</llo_original>
